<compile_context>
chip_gen: v7x
topology: tpu7x:2x2x1
jax: 0.10.0
libtpu: 0.0.40
codegen_flags: <defaults>
</compile_context>

<pallas_src>
import jax
import jax.numpy as jnp
from jax.experimental import pallas as pl
from jax.experimental.pallas import tpu as pltpu


# --------------------------------------------------------------------------- #
# Kernels
# --------------------------------------------------------------------------- #
def _add_pos_tiled_kernel(x_ref, pos_ref, o_ref):
    # x_ref, o_ref: (TS, D) tile of one batch element (batch dim squeezed).
    # pos_ref:      (TS, D) positional tile for the same seq rows, shared over
    #               the inner batch axis (DMA'd once per seq tile).
    out_dt = o_ref.dtype
    o_ref[...] = x_ref[...].astype(out_dt) + pos_ref[...].astype(out_dt)


def _add_pos_resident_kernel(x_ref, pos_ref, o_ref):
    # pos_ref holds ALL S positional rows resident in VMEM (single DMA, one
    # buffer); slice the rows matching this seq tile with an aligned offset.
    out_dt = o_ref.dtype
    ts = x_ref.shape[0]
    start = pl.multiple_of(pl.program_id(0) * ts, ts)
    pos_tile = pos_ref[pl.ds(start, ts), :]
    o_ref[...] = x_ref[...].astype(out_dt) + pos_tile.astype(out_dt)


# --------------------------------------------------------------------------- #
# Tiling heuristics
# --------------------------------------------------------------------------- #
def _sublane_granule(*dtypes):
    """Rows per fully-packed vreg: 8 for 4-byte, 16 for 2-byte, 32 for 1-byte."""
    min_itemsize = min(jnp.dtype(d).itemsize for d in dtypes)
    return max(8, 32 // max(1, min_itemsize))


def _pick_seq_tile(S, D, granule, itemsize, target_bytes=4 * 1024 * 1024):
    """Largest granule-multiple seq tile with one (TS, D) block <= ~target_bytes."""
    bytes_per_row = max(1, D * itemsize)
    ts = (target_bytes // bytes_per_row) // granule * granule
    ts = max(granule, ts)
    s_cap = pl.cdiv(S, granule) * granule  # never larger than (padded) S
    return min(ts, s_cap)


# --------------------------------------------------------------------------- #
# pallas_call wrapper
# --------------------------------------------------------------------------- #
def _pallas_broadcast_add(x, pos, out_dtype):
    """x: (B, S, D); pos: (P, D) with P >= S. Returns x + pos[:S][None]."""
    B, S, D = x.shape
    itemsizes = [jnp.dtype(d).itemsize for d in (x.dtype, pos.dtype, out_dtype)]
    granule = _sublane_granule(x.dtype, pos.dtype, out_dtype)

    TS = _pick_seq_tile(S, D, granule, max(itemsizes))
    if TS >= S:
        TS = S  # full-extent seq block: always layout-legal
    num_s = pl.cdiv(S, TS)

    # v7x megacore: guarantee >= 2 independent grid steps when batch can't help.
    if B == 1 and num_s < 2 and S >= 2 * granule:
        TS = max(granule, (S // 2) // granule * granule)
        num_s = pl.cdiv(S, TS)

    # Seq tiles OUTER, batch INNER: the pos block index is constant over the
    # inner axis, so its DMA is issued once per seq tile, not once per step.
    grid = (num_s, B)

    # Keep the whole (S, D) positional slab resident in VMEM when small and
    # layout-legal (one DMA total, frees a pipeline buffer); else tile it.
    pos_bytes = S * D * jnp.dtype(pos.dtype).itemsize
    pos_resident = (
        pos_bytes <= 2 * 1024 * 1024 and S % granule == 0 and S % TS == 0
    )
    if pos_resident:
        kernel = _add_pos_resident_kernel
        pos_spec = pl.BlockSpec((S, D), lambda s, b: (0, 0))
    else:
        kernel = _add_pos_tiled_kernel
        pos_spec = pl.BlockSpec((TS, D), lambda s, b: (s, 0))

    # "arbitrary" inner batch axis pins sequential iteration over b (locks in
    # the pos revisit skip, free on single-TC chips); with only one seq tile,
    # keep batch "parallel" so v7x megacore still has parallel work.
    semantics = ("parallel", "arbitrary") if num_s >= 2 else ("parallel", "parallel")

    # Alias x -> output (same shape/dtype/block layout): no extra HBM output
    # allocation in real graphs.
    alias = {0: 0} if jnp.dtype(x.dtype) == jnp.dtype(out_dtype) else {}

    cost = pl.CostEstimate(
        flops=B * S * D,
        transcendentals=0,
        bytes_accessed=B * S * D * (itemsizes[0] + itemsizes[2]) + S * D * itemsizes[1],
    )

    return pl.pallas_call(
        kernel,
        out_shape=jax.ShapeDtypeStruct((B, S, D), out_dtype),
        grid=grid,
        in_specs=[
            pl.BlockSpec((pl.Squeezed(), TS, D), lambda s, b: (b, s, 0)),  # x
            pos_spec,                                                      # pos table
        ],
        out_specs=pl.BlockSpec((pl.Squeezed(), TS, D), lambda s, b: (b, s, 0)),
        input_output_aliases=alias,
        cost_estimate=cost,
        compiler_params=pltpu.CompilerParams(
            dimension_semantics=semantics,
        ),
    )(x, pos)


def learned_positional_encoding(x, pos_embedding_table):
    """x: (B, S, D); pos_embedding_table: (max_len, D). Returns x + table[:S]."""
    B, S, D = x.shape
    # Match PyTorch type promotion (e.g. bf16 x + f32 table -> f32 output).
    out_dtype = jnp.promote_types(x.dtype, pos_embedding_table.dtype)
    granule = _sublane_granule(x.dtype, pos_embedding_table.dtype, out_dtype)

    if D % 128 != 0 and (S * D) % 128 == 0:
        # Lane-dense repack for small d_model: flatten the (S, D) plane to a
        # 128-lane layout so stores are unmasked full-width vst. Elementwise add
        # with pos broadcast over batch, so the repack is exact.
        pos = pos_embedding_table[:S]
        Sp = (S * D) // 128
        out = _pallas_broadcast_add(
            x.reshape(B, Sp, 128), pos.reshape(Sp, 128), out_dtype
        )
        return out.reshape(B, S, D)

    if S % granule == 0:
        # arange(S) lookup == row prefix of the table; expressed by the
        # BlockSpec index_map, so feed the table directly (no wrapper slice).
        pos = pos_embedding_table
    else:
        # Awkward S: slice so a full-extent seq block stays layout-legal.
        pos = pos_embedding_table[:S]

    return _pallas_broadcast_add(x, pos, out_dtype)


if __name__ == "__main__":
    # Small shapes consistent with the module: d_model=512 (per spec), short seq.
    batch, seq_len, d_model, max_len = 2, 8, 512, 64

    key = jax.random.PRNGKey(0)
    kx, kw = jax.random.split(key)

    x = jax.random.normal(kx, (batch, seq_len, d_model), dtype=jnp.float32)
    # Deterministic stand-in for nn.Embedding(max_len, d_model).weight (~N(0,1)).
    pos_embedding_table = jax.random.normal(kw, (max_len, d_model), dtype=jnp.float32)

    # Reference computed first (x may be donated into the output via aliasing).
    ref = x + pos_embedding_table[:seq_len][None, :, :]

    out = learned_positional_encoding(x, pos_embedding_table)
    out = jax.block_until_ready(out)

    assert out.shape == (batch, seq_len, d_model)
    assert out.dtype == ref.dtype
    assert jnp.allclose(out, ref, atol=1e-6), "mismatch vs reference"

    print("KERNEL_OK")
</pallas_src>

<mosaic_0001>
module attributes {stable_mosaic.version = 11 : i64} {
  func.func @_add_pos_resident_kernel(%arg0: i32, %arg1: i32, %arg2: memref<1x8x512xf32, #tpu.memory_space<vmem>>, %arg3: memref<8x512xf32, #tpu.memory_space<vmem>>, %arg4: memref<1x8x512xf32, #tpu.memory_space<vmem>>) attributes {dimension_semantics = [#tpu.dimension_semantics<parallel>, #tpu.dimension_semantics<parallel>], iteration_bounds = array<i64: 1, 2>, scalar_prefetch = 0 : i64, scratch_operands = 0 : i64, tpu.core_type = #tpu.core_type<tc>, window_params = [{transform_indices = @transform_0, window_bounds = array<i64: 1, 8, 512>}, {transform_indices = @transform_1, window_bounds = array<i64: 8, 512>}, {transform_indices = @transform_2, window_bounds = array<i64: 1, 8, 512>}]} {
    %c8_i32 = arith.constant 8 : i32
    %0 = arith.muli %arg0, %c8_i32 : i32
    %1 = tpu.assume_multiple %0, 8 : i32
    %2 = arith.index_cast %1 : i32 to index
    %c0 = arith.constant 0 : index
    %3 = vector.load %arg3[%2, %c0] : memref<8x512xf32, #tpu.memory_space<vmem>>, vector<8x512xf32>
    %c0_0 = arith.constant 0 : index
    %c0_1 = arith.constant 0 : index
    %c0_2 = arith.constant 0 : index
    %4 = vector.load %arg2[%c0_0, %c0_1, %c0_2] : memref<1x8x512xf32, #tpu.memory_space<vmem>>, vector<1x8x512xf32>
    %5 = vector.shape_cast %4 : vector<1x8x512xf32> to vector<8x512xf32>
    %6 = arith.addf %5, %3 : vector<8x512xf32>
    %c0_3 = arith.constant 0 : index
    %c0_4 = arith.constant 0 : index
    %c0_5 = arith.constant 0 : index
    %7 = vector.load %arg4[%c0_3, %c0_4, %c0_5] : memref<1x8x512xf32, #tpu.memory_space<vmem>>, vector<1x8x512xf32>
    %8 = vector.shape_cast %7 : vector<1x8x512xf32> to vector<8x512xf32>
    %9 = vector.shape_cast %6 : vector<8x512xf32> to vector<1x8x512xf32>
    tpu.vector_store %arg4[%c0_3, %c0_4, %c0_5], %9 {strides = array<i32>} : memref<1x8x512xf32, #tpu.memory_space<vmem>>, vector<1x8x512xf32>,
    return
  }
  func.func @transform_0(%arg0: i32, %arg1: i32) -> (i32, i32, i32) {
    %c0_i32 = arith.constant 0 : i32
    %c0_i32_0 = arith.constant 0 : i32
    return %arg1, %arg0, %c0_i32 : i32, i32, i32
  }
  func.func @transform_1(%arg0: i32, %arg1: i32) -> (i32, i32) {
    %c0_i32 = arith.constant 0 : i32
    %c0_i32_0 = arith.constant 0 : i32
    %c0_i32_1 = arith.constant 0 : i32
    return %c0_i32, %c0_i32_0 : i32, i32
  }
  func.func @transform_2(%arg0: i32, %arg1: i32) -> (i32, i32, i32) {
    %c0_i32 = arith.constant 0 : i32
    %c0_i32_0 = arith.constant 0 : i32
    return %arg1, %arg0, %c0_i32 : i32, i32, i32
  }
}

</mosaic_0001>

<llo_original>
// kernel: tpu_custom_call.1
$region0: #{tpu_custom_call.1}
  #allocation0 [shape = 'u32[]', space=smem, size = 0x4, offset = 0x4, fixed_abs, tag = 'smem constant byte address 0x4 - core index']
  #allocation1 [shape = 'u32[144,128]{1,0:T(1,128)}', space=vmem, size = 0x12000, scoped, tag = 'internal scratch']
  %s0 = inlined_call_operand.hbm [shape: f32[2,8,512], index: 0, kind: input, shape index: {}, may-alias: {0,2}]
  %s1 = inlined_call_operand.hbm [shape: f32[64,512], index: 1, kind: input, shape index: {}]
  %s2 = inlined_call_operand.hbm [shape: f32[2,8,512], index: 2, kind: output, shape index: {}, may-alias: {0,2}]
  %s3 = sld [smem:[#allocation0]]
  $region49: #{tpu_custom_call.1} parent=0
    _
  %s5 = ssub.s32 1, %s3
  %s6 = scalar_select 0, %s5, %s3
  $region1: #{tpu_custom_call.1} parent=0
    #allocation2 [shape = 'u8[32768]{0}', space=vmem, size = 0x8000, scoped, tag = 'input window, operand 0']
    #allocation3 [shape = 's32[2]{0}', space=sflag, size = 0x8, scoped, tag = 'scoped memory for tpu_custom_call.1']
    #allocation4 [shape = 's32[2]{0}', space=sflag, size = 0x8, scoped, tag = 'scoped memory for tpu_custom_call.1']
    #allocation5 [shape = 'u8[16384]{0}', space=vmem, size = 0x4000, scoped, tag = 'input window, operand 1, single buffered']
    #allocation6 [shape = 's32[1]{0}', space=sflag, size = 0x4, scoped, tag = 'scoped memory for tpu_custom_call.1']
    #allocation7 [shape = 'u8[32768]{0}', space=vmem, size = 0x8000, scoped, tag = 'output window, operand 0']
    %7 = vsyncpa [#allocation3], 0
    %s8 = scalar_lea.sflag [#allocation3], 1
    %9 = vsyncpa %s8, 0
    %10 = vsyncpa [#allocation6], 0
    %11 = vsyncpa [#allocation4], 0
    %s12 = scalar_lea.sflag [#allocation4], 1
    %13 = vsyncpa %s12, 0
    loop: start=0, step=1, limit=4
    $region2: #{tpu_custom_call.1} parent=1 // loop_pre_header
      _
    $region3: #{tpu_custom_call.1} parent=1 // loop_header
      %s15 = sphi 0, %s19
      %p16 = scmp.ge.s32.totalorder %s15, 4
      %s22 = sphi 0, %s34
      %s23 = sphi 0, %s30
      %s24 = sphi 0, %s22
      %s25 = sphi 0, %s23
      %s26 = sphi 0, %s24
      %s27 = sphi 0, %s25
      %s39 = sphi 0, %s41
      %s42 = sphi 0, %s39
      %s43 = sphi 0, %s42
      %s59 = sphi 0, %s43
      %s63 = sphi 0, %s63
      %s65 = sphi 0, %s63
      %s66 = sphi 0, %s65
      %s80 = sphi 0, %s66
      %s88 = sphi 0, %s90
      %s91 = sphi 0, %s88
      %s92 = sphi 0, %s91
      %s108 = sphi 0, %s92
    $region4: #{tpu_custom_call.1} parent=1 // loop_header_branch
      %18 = sbr.rel (%p16) target = $region8
    $region5: #{tpu_custom_call.1} parent=1 // loop_body
      %s20 = ssub.s32 %s15, 1
      %s21 = ssub.s32 %s15, 2
      %s28 = sadd.s32 1, %s23
      %p29 = scmp.ge.s32.totalorder %s28, 2
      %s30 = scalar_select %p29, 0, %s28
      %s31 = sadd.s32 1, %s22
      %s32 = scalar_select %p29, %s31, %s22
      %p33 = scmp.ge.s32.totalorder %s32, 1
      %s34 = scalar_select %p33, 0, %s32
      %s35 = ssub.s32 %s23, %s30
      %s36 = ssub.s32 %s22, %s34
      %s37 = sor.u32 %s35, %s36
      %p38 = scmp.eq.s32.totalorder %s37, 0
      %s40 = sadd.s32 %s39, 1
      %s41 = scalar_select %p38, %s39, %s40
      %p44 = pneg %p38
      %p45 = scmp.eq.s32.totalorder %s15, 1
      %p46 = por %p44, %p45
      %p47 = scmp.ne.s32.totalorder %s39, %s42
      %p48 = scmp.eq.s32.totalorder %s15, 0
      %p49 = por %p47, %p48
      %p50 = scmp.ne.s32.totalorder %s39, %s42
      %p51 = scmp.eq.s32.totalorder %s20, 1
      %p52 = por %p50, %p51
      %p53 = scmp.ne.s32.totalorder %s42, %s43
      %p54 = scmp.eq.s32.totalorder %s20, 0
      %p55 = por %p53, %p54
      %p56 = scmp.ne.s32.totalorder %s42, %s43
      %p57 = scmp.eq.s32.totalorder %s21, 1
      %p58 = por %p56, %p57
      %p60 = scmp.ne.s32.totalorder %s43, %s59
      %p61 = scmp.eq.s32.totalorder %s21, 0
      %p62 = por %p60, %p61
      %s64 = sadd.s32 %s63, 1
      %p67 = scmp.eq.s32.totalorder %s15, 1
      %p68 = scmp.ne.s32.totalorder %s63, %s65
      %p69 = scmp.eq.s32.totalorder %s15, 0
      %p70 = por %p68, %p69
      %p71 = scmp.ne.s32.totalorder %s63, %s65
      %p72 = scmp.eq.s32.totalorder %s20, 1
      %p73 = por %p71, %p72
      %p74 = scmp.ne.s32.totalorder %s65, %s66
      %p75 = scmp.eq.s32.totalorder %s20, 0
      %p76 = por %p74, %p75
      %p77 = scmp.ne.s32.totalorder %s65, %s66
      %p78 = scmp.eq.s32.totalorder %s21, 1
      %p79 = por %p77, %p78
      %p81 = scmp.ne.s32.totalorder %s66, %s80
      %p82 = scmp.eq.s32.totalorder %s21, 0
      %p83 = por %p81, %p82
      %s84 = ssub.s32 %s23, %s30
      %s85 = ssub.s32 %s22, %s34
      %s86 = sor.u32 %s84, %s85
      %p87 = scmp.eq.s32.totalorder %s86, 0
      %s89 = sadd.s32 %s88, 1
      %s90 = scalar_select %p87, %s88, %s89
      %p93 = pneg %p87
      %p94 = scmp.eq.s32.totalorder %s15, 1
      %p95 = por %p93, %p94
      %p96 = scmp.ne.s32.totalorder %s88, %s91
      %p97 = scmp.eq.s32.totalorder %s15, 0
      %p98 = por %p96, %p97
      %p99 = scmp.ne.s32.totalorder %s88, %s91
      %p100 = scmp.eq.s32.totalorder %s20, 1
      %p101 = por %p99, %p100
      %p102 = scmp.ne.s32.totalorder %s91, %s92
      %p103 = scmp.eq.s32.totalorder %s20, 0
      %p104 = por %p102, %p103
      %p105 = scmp.ne.s32.totalorder %s91, %s92
      %p106 = scmp.eq.s32.totalorder %s21, 1
      %p107 = por %p105, %p106
      %p109 = scmp.ne.s32.totalorder %s92, %s108
      %p110 = scmp.eq.s32.totalorder %s21, 0
      %p111 = por %p109, %p110
      %p112 = scmp.le.s32.totalorder 1, %s15
      %p113 = scmp.lt.s32.totalorder %s15, 3
      %p114 = pnand %p112, %p113
      %p115 = pneg %p114
      // Predicated region
      $region9: #{tpu_custom_call.1} parent=5 // pred_check
        _
      $region10: #{tpu_custom_call.1} parent=5 // pred_check_branch
        %117 = sbr.rel (%p114) target = $region12
      $region11: #{tpu_custom_call.1} parent=5 // pred_region
        %s118 = ssub.s32 %s15, 1
        // Predicated region
        $region13: #{tpu_custom_call.1} parent=11 // pred_check
          %p119 = pneg %p76
        $region14: #{tpu_custom_call.1} parent=11 // pred_check_branch
          %121 = sbr.rel (%p119) target = $region16
        $region15: #{tpu_custom_call.1} parent=11 // pred_region
          %s123 = ssub.s32 512, 512
          %124 = vsyncadd [#allocation6], %s123
          %s126 = sshll.u32 [#allocation5], 4
          %s127 = int_to_ptr.vmem [resolvable:$true] %s126
          %129 = dma.hbm_to_vmem [thread:$0]  %s1, 512, %s127, [#allocation6]
        $region16: #{tpu_custom_call.1} parent=11 // pred_fallthru
          _
      $region12: #{tpu_custom_call.1} parent=5 // pred_fallthru
        _
      %p130 = scmp.lt.s32.totalorder %s15, 2
      // Predicated region
      $region17: #{tpu_custom_call.1} parent=5 // pred_check
        %p131 = pneg %p130
      $region18: #{tpu_custom_call.1} parent=5 // pred_check_branch
        %133 = sbr.rel (%p131) target = $region20
      $region19: #{tpu_custom_call.1} parent=5 // pred_region
        // Predicated region
        $region21: #{tpu_custom_call.1} parent=19 // pred_check
          %p134 = pneg %p49
        $region22: #{tpu_custom_call.1} parent=19 // pred_check_branch
          %136 = sbr.rel (%p134) target = $region24
        $region23: #{tpu_custom_call.1} parent=19 // pred_region
          %s137 = sand.u32 %s39, 1
          %s138 = scalar_lea.sflag [#allocation3], %s137
          %s139 = sand.u32 %s39, 1
          %s140 = smul.addr %s139, 32
          %s141 = scalar_lea.vmem [#allocation2], %s140
          %s143 = ssub.s32 512, 512
          %144 = vsyncadd %s138, %s143
          %s145 = smul.addr %s22, 4
          %s146 = smul.addr %s23, 4
          %s147 = sadd.s32 %s145, %s146
          %s148 = smul.addr %s147, 128
          %s149 = scalar_lea.hbm %s0, %s148
          %s151 = sshll.u32 %s141, 4
          %s152 = int_to_ptr.vmem [resolvable:$true] %s151
          %154 = dma.hbm_to_vmem [thread:$0]  %s149, 512, %s152, %s138
        $region24: #{tpu_custom_call.1} parent=19 // pred_fallthru
          _
      $region20: #{tpu_custom_call.1} parent=5 // pred_fallthru
        _
      %p155 = scmp.le.s32.totalorder 1, %s15
      %p156 = scmp.lt.s32.totalorder %s15, 3
      %p157 = pnand %p155, %p156
      %p158 = pneg %p157
      // Predicated region
      $region25: #{tpu_custom_call.1} parent=5 // pred_check
        _
      $region26: #{tpu_custom_call.1} parent=5 // pred_check_branch
        %160 = sbr.rel (%p157) target = $region28
      $region27: #{tpu_custom_call.1} parent=5 // pred_region
        %s161 = ssub.s32 %s15, 1
        %s162 = sand.u32 %s42, 1
        %s163 = scalar_lea.sflag [#allocation3], %s162
        %s164 = sand.u32 %s42, 1
        %s165 = smul.addr %s164, 32
        %s166 = scalar_lea.vmem [#allocation2], %s165
        // Predicated region
        $region29: #{tpu_custom_call.1} parent=27 // pred_check
          %p167 = pneg %p55
        $region30: #{tpu_custom_call.1} parent=27 // pred_check_branch
          %169 = sbr.rel (%p167) target = $region32
        $region31: #{tpu_custom_call.1} parent=27 // pred_region
          %170 = dma.done %s163, 512
        $region32: #{tpu_custom_call.1} parent=27 // pred_fallthru
          _
        // Predicated region
        $region33: #{tpu_custom_call.1} parent=27 // pred_check
          %p171 = pneg %p76
        $region34: #{tpu_custom_call.1} parent=27 // pred_check_branch
          %173 = sbr.rel (%p171) target = $region36
        $region35: #{tpu_custom_call.1} parent=27 // pred_region
          %174 = dma.done [#allocation6], 512
        $region36: #{tpu_custom_call.1} parent=27 // pred_fallthru
          _
        %s175 = sand.u32 %s42, 1
        %s176 = scalar_lea.sflag [#allocation3], %s175
        %s177 = sand.u32 %s42, 1
        %s178 = smul.addr %s177, 32
        %s179 = scalar_lea.vmem [#allocation2], %s178
        %p180 = pneg %p55
        %p181 = pneg %p52
        %p182 = pneg %p76
        %p183 = pneg %p73
        %p184 = pneg %p104
        %p185 = pneg %p101
        %s186 = sand.u32 %s91, 1
        %s187 = scalar_lea.sflag [#allocation4], %s186
        %s188 = sand.u32 %s91, 1
        %s189 = smul.addr %s188, 32
        %s190 = scalar_lea.vmem [#allocation7], %s189
        %s191 = smul.u32 %s24, 8
        %s192 = sshra.s32 %s191, 3
        %s193 = sand.u32 %s191, 7
        %s194 = smul.u32 %s192, 4
        %s195 = smul.addr %s194, 8
        %s196 = scalar_lea.vmem [#allocation5], %s195
        %v197 = vld [vmem:[%s196] sm:$0xff]
        %v198 = vld [vmem:[%s196 + $0x8] sm:$0xff]
        %v199 = vld [vmem:[%s196 + $0x10] sm:$0xff]
        %v200 = vld [vmem:[%s196 + $0x18] sm:$0xff]
        %v201 = vld [vmem:[%s166] sm:$0xff]
        %v202 = vld [vmem:[%s166 + $0x8] sm:$0xff]
        %v203 = vld [vmem:[%s166 + $0x10] sm:$0xff]
        %v204 = vld [vmem:[%s166 + $0x18] sm:$0xff]
        %v205 = vadd.f32 %v201, %v197
        %v206 = vadd.f32 %v202, %v198
        %v207 = vadd.f32 %v203, %v199
        %v208 = vadd.f32 %v204, %v200
        %209 = vst [vmem:[%s190] sm:$0xff] %v205
        %210 = vst [vmem:[%s190 + $0x8] sm:$0xff] %v206
        %211 = vst [vmem:[%s190 + $0x10] sm:$0xff] %v207
        %212 = vst [vmem:[%s190 + $0x18] sm:$0xff] %v208
        %s213 = sand.u32 %s91, 1
        %s214 = scalar_lea.sflag [#allocation4], %s213
        %s215 = sand.u32 %s91, 1
        %s216 = smul.addr %s215, 32
        %s217 = scalar_lea.vmem [#allocation7], %s216
        // Predicated region
        $region37: #{tpu_custom_call.1} parent=27 // pred_check
          %p218 = pneg %p101
        $region38: #{tpu_custom_call.1} parent=27 // pred_check_branch
          %220 = sbr.rel (%p218) target = $region40
        $region39: #{tpu_custom_call.1} parent=27 // pred_region
          %s222 = ssub.s32 512, 512
          %223 = vsyncadd %s214, %s222
          %s224 = smul.addr %s24, 4
          %s225 = smul.addr %s25, 4
          %s226 = sadd.s32 %s224, %s225
          %s227 = smul.addr %s226, 128
          %s228 = scalar_lea.hbm %s2, %s227
          %s230 = sshll.u32 %s217, 4
          %s231 = int_to_ptr.vmem [resolvable:$true] %s230
          %233 = dma.vmem_to_hbm [thread:$0]  %s231, 512, %s228, %s214
        $region40: #{tpu_custom_call.1} parent=27 // pred_fallthru
          _
      $region28: #{tpu_custom_call.1} parent=5 // pred_fallthru
        _
      %p234 = scmp.le.s32.totalorder 2, %s15
      // Predicated region
      $region41: #{tpu_custom_call.1} parent=5 // pred_check
        %p235 = pneg %p234
      $region42: #{tpu_custom_call.1} parent=5 // pred_check_branch
        %237 = sbr.rel (%p235) target = $region44
      $region43: #{tpu_custom_call.1} parent=5 // pred_region
        %s238 = ssub.s32 %s15, 2
        // Predicated region
        $region45: #{tpu_custom_call.1} parent=43 // pred_check
          %p239 = pneg %p107
        $region46: #{tpu_custom_call.1} parent=43 // pred_check_branch
          %241 = sbr.rel (%p239) target = $region48
        $region47: #{tpu_custom_call.1} parent=43 // pred_region
          %s242 = sand.u32 %s92, 1
          %s243 = scalar_lea.sflag [#allocation4], %s242
          %s244 = sand.u32 %s92, 1
          %s245 = smul.addr %s244, 32
          %s246 = scalar_lea.vmem [#allocation7], %s245
          %247 = dma.done %s243, 512
        $region48: #{tpu_custom_call.1} parent=43 // pred_fallthru
          _
      $region44: #{tpu_custom_call.1} parent=5 // pred_fallthru
        _
    $region6: #{tpu_custom_call.1} parent=1 // loop_footer
      %s19 = sadd.s32 1, %s15
    $region7: #{tpu_custom_call.1} parent=1 // loop_footer_branch
      %14 = sbr.rel target = $region3
    $region8: #{tpu_custom_call.1} parent=1 // loop_exit
      _
    %248 = vsyncpa [#allocation3], 1
    %s249 = scalar_lea.sflag [#allocation3], 1
    %250 = vsyncpa %s249, 1
    %251 = vsyncpa [#allocation6], 1
    %252 = vsyncpa [#allocation4], 1
    %s253 = scalar_lea.sflag [#allocation4], 1
    %254 = vsyncpa %s253, 1

</llo_original>
